<compile_context>
chip_gen: v6e
topology: v6e:2x2x1
jax: 0.10.0
libtpu: 0.0.40
codegen_flags: <defaults>
</compile_context>

<pallas_src>
import math
import functools

import jax
import jax.numpy as jnp
from jax import lax
from jax.experimental import pallas as pl
from jax.experimental.pallas import tpu as pltpu


_DEFAULT_VMEM_BUDGET = 48 * 1024 * 1024  # safe on every generation (v7x = 64 MiB)


def _vmem_budget_bytes() -> int:
    """~70% of physical VMEM (generation-aware) with a conservative fallback."""
    try:
        info = pltpu.get_tpu_info()
        cap = int(getattr(info, "vmem_capacity_bytes", 0) or 0)
        if cap > 0:
            return int(cap * 0.7)
    except Exception:
        pass
    return _DEFAULT_VMEM_BUDGET


def _pick_tile(n: int, fits, cap: int) -> int:
    """Largest tile t (t == n, or t | n with t % 8 == 0), t <= cap, passing fits(t)."""
    cands = []
    if n <= cap:
        cands.append(n)  # full-extent block
    for t in range(min(cap, n - 1), 7, -1):
        if n % t == 0 and t % 8 == 0:
            cands.append(t)
    if not cands:
        cands.append(n)  # degenerate fallback: single full-extent block
    for t in cands:
        if fits(t):
            return t
    return cands[-1]  # smallest candidate if nothing "fits" (still correct)


# --------------------------------------------------------------------------
# Pass 1: fused QKV projection.
# --------------------------------------------------------------------------
def _qkv_proj_kernel(x_ref, w_ref, q_ref, k_ref, v_ref, *, head_size: int):
    H = head_size
    x = x_ref[0]          # (tT, C)  bf16
    w = w_ref[...]        # (C, 3H)  bf16  (= [Wq/sqrt(H) | Wk | Wv])

    # Single wide MXU pass, f32 accumulation.
    qkv = jnp.dot(x, w, preferred_element_type=jnp.float32)   # (tT, 3H) f32
    qkv = qkv.astype(jnp.bfloat16)

    # H may be < 128, so these lane slices relayout — but only once per token
    # tile, amortized against the (tT, C) x (C, 3H) matmul above.
    q_ref[0] = qkv[:, :H]
    k_ref[0] = qkv[:, H:2 * H]
    v_ref[0] = qkv[:, 2 * H:]


# --------------------------------------------------------------------------
# Pass 2: attention over precomputed q/k/v.
# --------------------------------------------------------------------------
def _attn_kernel(q_ref, k_ref, v_ref, o_ref, wei_ref, *, masked: bool, q_tile: int):
    q = q_ref[0]          # (tq, H) bf16, already scaled by 1/sqrt(H)
    k = k_ref[0]          # (T,  H) bf16
    v = v_ref[0]          # (T,  H) bf16

    # scores = q @ k^T without materializing a transpose of k.
    scores = lax.dot_general(
        q, k, (((1,), (1,)), ((), ())),
        preferred_element_type=jnp.float32)                    # (tq, T) f32

    if masked:
        qi = pl.program_id(1)
        row = qi * q_tile + lax.broadcasted_iota(jnp.int32, scores.shape, 0)
        col = lax.broadcasted_iota(jnp.int32, scores.shape, 1)
        # Large finite negative instead of -inf: exp() flushes to exactly 0
        # and a fully masked row can never produce NaN.
        scores = jnp.where(col <= row, scores, -1e30)

    # Numerically stable softmax in f32 (kept f32 for v5e's VPU/EUP).
    m = jnp.max(scores, axis=-1, keepdims=True)
    e = jnp.exp(scores - m)
    denom = jnp.sum(e, axis=-1, keepdims=True)
    wei = e * pl.reciprocal(denom, approx=True)                # (tq, T) f32

    out = jnp.dot(wei.astype(jnp.bfloat16), v,
                  preferred_element_type=jnp.float32)          # (tq, H) f32

    o_ref[0] = out.astype(o_ref.dtype)
    wei_ref[0] = wei.astype(wei_ref.dtype)


# --------------------------------------------------------------------------
# Wrapper.
# --------------------------------------------------------------------------
def head_forward(x, wq, wk, wv, *, masked: bool = False,
                 wei_dtype=jnp.float32):
    """x: (B,T,C) f32; wq/wk/wv: (C,H) f32 -> (out (B,T,H) f32, wei (B,T,T))."""
    B, T, C = x.shape
    H = wq.shape[1]
    budget = _vmem_budget_bytes()

    # Fold 1/sqrt(head_size) into the q weights (exact f32 scale, then bf16).
    scale = 1.0 / math.sqrt(H)
    w_qkv = jnp.concatenate(
        [wq.astype(jnp.float32) * scale, wk.astype(jnp.float32),
         wv.astype(jnp.float32)], axis=1).astype(jnp.bfloat16)      # (C, 3H)
    x_bf = x.astype(jnp.bfloat16)

    # ---------------- pass 1: qkv projection ----------------
    def proj_bytes(tT):
        inputs = 2 * 2 * (tT * C + C * 3 * H)        # bf16, double-buffered
        outputs = 2 * 3 * (tT * H * 2)               # bf16, double-buffered
        temps = 2 * (tT * 3 * H * 4)                 # f32 acc + bf16 copy
        return inputs + outputs + temps

    tT = _pick_tile(T, lambda t: proj_bytes(t) <= budget, cap=1024)

    q_bf, k_bf, v_bf = pl.pallas_call(
        functools.partial(_qkv_proj_kernel, head_size=H),
        out_shape=(
            jax.ShapeDtypeStruct((B, T, H), jnp.bfloat16),
            jax.ShapeDtypeStruct((B, T, H), jnp.bfloat16),
            jax.ShapeDtypeStruct((B, T, H), jnp.bfloat16),
        ),
        grid_spec=pltpu.PrefetchScalarGridSpec(
            num_scalar_prefetch=0,
            grid=(B, T // tT),
            in_specs=[
                pl.BlockSpec((1, tT, C), lambda b, ti: (b, ti, 0)),
                pl.BlockSpec((C, 3 * H), lambda b, ti: (0, 0)),
            ],
            out_specs=[
                pl.BlockSpec((1, tT, H), lambda b, ti: (b, ti, 0)),
                pl.BlockSpec((1, tT, H), lambda b, ti: (b, ti, 0)),
                pl.BlockSpec((1, tT, H), lambda b, ti: (b, ti, 0)),
            ],
        ),
        compiler_params=pltpu.CompilerParams(
            dimension_semantics=("parallel", "parallel"),
            vmem_limit_bytes=budget),
    )(x_bf, w_qkv)

    # ---------------- pass 2: attention ----------------
    wei_bytes = jnp.dtype(wei_dtype).itemsize

    def attn_bytes(tq):
        inputs = 2 * 2 * (tq * H + 2 * T * H)                 # bf16 q/k/v, dbl-buf
        outputs = 2 * (tq * H * 4 + tq * T * wei_bytes)       # o + wei, dbl-buf
        temps = 4 * (tq * T * 4)                              # live f32 (tq,T) temps
        return inputs + outputs + temps

    tq = _pick_tile(T, lambda t: attn_bytes(t) <= budget, cap=512)

    out, wei = pl.pallas_call(
        functools.partial(_attn_kernel, masked=masked, q_tile=tq),
        out_shape=(
            jax.ShapeDtypeStruct((B, T, H), jnp.float32),
            jax.ShapeDtypeStruct((B, T, T), wei_dtype),
        ),
        grid_spec=pltpu.PrefetchScalarGridSpec(
            num_scalar_prefetch=0,
            grid=(B, T // tq),
            in_specs=[
                pl.BlockSpec((1, tq, H), lambda b, qi: (b, qi, 0)),
                pl.BlockSpec((1, T, H), lambda b, qi: (b, 0, 0)),
                pl.BlockSpec((1, T, H), lambda b, qi: (b, 0, 0)),
            ],
            out_specs=[
                pl.BlockSpec((1, tq, H), lambda b, qi: (b, qi, 0)),
                pl.BlockSpec((1, tq, T), lambda b, qi: (b, qi, 0)),
            ],
        ),
        compiler_params=pltpu.CompilerParams(
            dimension_semantics=("parallel", "parallel"),
            vmem_limit_bytes=budget),
    )(q_bf, k_bf, v_bf)

    return out, wei


# --------------------------------------------------------------------------
# Reference + self-test.
# --------------------------------------------------------------------------
def _reference(x, wq, wk, wv, masked):
    q = x @ wq
    k = x @ wk
    v = x @ wv
    H = wq.shape[1]
    wei = (q @ jnp.swapaxes(k, -2, -1)) / math.sqrt(H)
    if masked:
        T = x.shape[1]
        tril = jnp.tril(jnp.ones((T, T)))
        wei = jnp.where(tril == 0, -jnp.inf, wei)
    wei = jax.nn.softmax(wei, axis=-1)
    return wei @ v, wei


if __name__ == "__main__":
    B, T, C, H = 2, 8, 32, 16
    key = jax.random.PRNGKey(0)
    kx, kq, kk, kv = jax.random.split(key, 4)

    x = jax.random.normal(kx, (B, T, C), dtype=jnp.float32)
    # Deterministic "nn.Linear"-style weights (uniform(-1/sqrt(C), 1/sqrt(C))),
    # stored transposed as (C, H) for the x @ W layout.
    bound = 1.0 / math.sqrt(C)
    wq = jax.random.uniform(kq, (C, H), jnp.float32, -bound, bound)
    wk = jax.random.uniform(kk, (C, H), jnp.float32, -bound, bound)
    wv = jax.random.uniform(kv, (C, H), jnp.float32, -bound, bound)

    for masked in (False, True):
        out, wei = head_forward(x, wq, wk, wv, masked=masked)
        jax.block_until_ready((out, wei))
        ref_out, ref_wei = _reference(x, wq, wk, wv, masked)
        # bf16 MXU operands + approx reciprocal -> loosened tolerance vs the
        # pure-f32 reference.
        assert jnp.allclose(out, ref_out, atol=2e-2, rtol=2e-2), (
            f"out mismatch (masked={masked}): "
            f"max abs err {jnp.max(jnp.abs(out - ref_out))}")
        assert jnp.allclose(wei, ref_wei, atol=2e-2, rtol=2e-2), (
            f"wei mismatch (masked={masked}): "
            f"max abs err {jnp.max(jnp.abs(wei - ref_wei))}")

    print("KERNEL_OK")
</pallas_src>

<mosaic_0001>
module attributes {stable_mosaic.version = 11 : i64} {
  func.func @_qkv_proj_kernel(%arg0: i32, %arg1: i32, %arg2: memref<1x8x32xbf16, #tpu.memory_space<vmem>>, %arg3: memref<32x48xbf16, #tpu.memory_space<vmem>>, %arg4: memref<1x8x16xbf16, #tpu.memory_space<vmem>>, %arg5: memref<1x8x16xbf16, #tpu.memory_space<vmem>>, %arg6: memref<1x8x16xbf16, #tpu.memory_space<vmem>>) attributes {dimension_semantics = [#tpu.dimension_semantics<parallel>, #tpu.dimension_semantics<parallel>], iteration_bounds = array<i64: 2, 1>, scalar_prefetch = 0 : i64, scratch_operands = 0 : i64, tpu.core_type = #tpu.core_type<tc>, window_params = [{transform_indices = @transform_0, window_bounds = array<i64: 1, 8, 32>}, {pipeline_mode = #tpu.pipeline_mode<synchronous>, transform_indices = @transform_1, window_bounds = array<i64: 32, 48>}, {transform_indices = @transform_2, window_bounds = array<i64: 1, 8, 16>}, {transform_indices = @transform_3, window_bounds = array<i64: 1, 8, 16>}, {transform_indices = @transform_4, window_bounds = array<i64: 1, 8, 16>}]} {
    %c0 = arith.constant 0 : index
    %c0_0 = arith.constant 0 : index
    %c0_1 = arith.constant 0 : index
    %0 = vector.load %arg2[%c0, %c0_0, %c0_1] : memref<1x8x32xbf16, #tpu.memory_space<vmem>>, vector<1x8x32xbf16>
    %1 = vector.shape_cast %0 : vector<1x8x32xbf16> to vector<8x32xbf16>
    %c0_2 = arith.constant 0 : index
    %c0_3 = arith.constant 0 : index
    %2 = vector.load %arg3[%c0_2, %c0_3] : memref<32x48xbf16, #tpu.memory_space<vmem>>, vector<32x48xbf16>
    %cst = arith.constant dense<0.000000e+00> : vector<8x48xf32>
    %3 = tpu.matmul %1, %2, %cst {dimension_numbers = #tpu.dot_dimension_numbers<[1], [0], [0], [1], [0, 0, 1, 1], [], []>} : vector<8x32xbf16>, vector<32x48xbf16>, vector<8x48xf32> -> vector<8x48xf32>
    %4 = arith.truncf %3 : vector<8x48xf32> to vector<8x48xbf16>
    %5 = vector.extract_strided_slice %4 {offsets = [0, 0], sizes = [8, 16], strides = [1, 1]} : vector<8x48xbf16> to vector<8x16xbf16>
    %c0_4 = arith.constant 0 : index
    %c0_5 = arith.constant 0 : index
    %c0_6 = arith.constant 0 : index
    %6 = vector.load %arg4[%c0_4, %c0_5, %c0_6] : memref<1x8x16xbf16, #tpu.memory_space<vmem>>, vector<1x8x16xbf16>
    %7 = vector.shape_cast %6 : vector<1x8x16xbf16> to vector<8x16xbf16>
    %8 = vector.shape_cast %5 : vector<8x16xbf16> to vector<1x8x16xbf16>
    tpu.vector_store %arg4[%c0_4, %c0_5, %c0_6], %8 {strides = array<i32>} : memref<1x8x16xbf16, #tpu.memory_space<vmem>>, vector<1x8x16xbf16>,
    %9 = vector.extract_strided_slice %4 {offsets = [0, 16], sizes = [8, 16], strides = [1, 1]} : vector<8x48xbf16> to vector<8x16xbf16>
    %c0_7 = arith.constant 0 : index
    %c0_8 = arith.constant 0 : index
    %c0_9 = arith.constant 0 : index
    %10 = vector.load %arg5[%c0_7, %c0_8, %c0_9] : memref<1x8x16xbf16, #tpu.memory_space<vmem>>, vector<1x8x16xbf16>
    %11 = vector.shape_cast %10 : vector<1x8x16xbf16> to vector<8x16xbf16>
    %12 = vector.shape_cast %9 : vector<8x16xbf16> to vector<1x8x16xbf16>
    tpu.vector_store %arg5[%c0_7, %c0_8, %c0_9], %12 {strides = array<i32>} : memref<1x8x16xbf16, #tpu.memory_space<vmem>>, vector<1x8x16xbf16>,
    %13 = vector.extract_strided_slice %4 {offsets = [0, 32], sizes = [8, 16], strides = [1, 1]} : vector<8x48xbf16> to vector<8x16xbf16>
    %c0_10 = arith.constant 0 : index
    %c0_11 = arith.constant 0 : index
    %c0_12 = arith.constant 0 : index
    %14 = vector.load %arg6[%c0_10, %c0_11, %c0_12] : memref<1x8x16xbf16, #tpu.memory_space<vmem>>, vector<1x8x16xbf16>
    %15 = vector.shape_cast %14 : vector<1x8x16xbf16> to vector<8x16xbf16>
    %16 = vector.shape_cast %13 : vector<8x16xbf16> to vector<1x8x16xbf16>
    tpu.vector_store %arg6[%c0_10, %c0_11, %c0_12], %16 {strides = array<i32>} : memref<1x8x16xbf16, #tpu.memory_space<vmem>>, vector<1x8x16xbf16>,
    return
  }
  func.func @transform_0(%arg0: i32, %arg1: i32) -> (i32, i32, i32) {
    %c0_i32 = arith.constant 0 : i32
    %c0_i32_0 = arith.constant 0 : i32
    return %arg0, %arg1, %c0_i32 : i32, i32, i32
  }
  func.func @transform_1(%arg0: i32, %arg1: i32) -> (i32, i32) {
    %c0_i32 = arith.constant 0 : i32
    %c0_i32_0 = arith.constant 0 : i32
    %c0_i32_1 = arith.constant 0 : i32
    return %c0_i32, %c0_i32_0 : i32, i32
  }
  func.func @transform_2(%arg0: i32, %arg1: i32) -> (i32, i32, i32) {
    %c0_i32 = arith.constant 0 : i32
    %c0_i32_0 = arith.constant 0 : i32
    return %arg0, %arg1, %c0_i32 : i32, i32, i32
  }
  func.func @transform_3(%arg0: i32, %arg1: i32) -> (i32, i32, i32) {
    %c0_i32 = arith.constant 0 : i32
    %c0_i32_0 = arith.constant 0 : i32
    return %arg0, %arg1, %c0_i32 : i32, i32, i32
  }
  func.func @transform_4(%arg0: i32, %arg1: i32) -> (i32, i32, i32) {
    %c0_i32 = arith.constant 0 : i32
    %c0_i32_0 = arith.constant 0 : i32
    return %arg0, %arg1, %c0_i32 : i32, i32, i32
  }
}

</mosaic_0001>

<llo_original>
// kernel: tpu_custom_call.1
$region0: #{tpu_custom_call.1}
  #allocation0 [shape = 'u32[]', space=smem, size = 0x4, offset = 0x4, fixed_abs, tag = 'smem constant byte address 0x4 - core index']
  #allocation1 [shape = 'u32[144,128]{1,0:T(1,128)}', space=vmem, size = 0x12000, scoped, tag = 'internal scratch']
  %s0 = inlined_call_operand.hbm [shape: bf16[2,8,32], index: 0, kind: input, shape index: {}]
  %s1 = inlined_call_operand.hbm [shape: bf16[32,48], index: 1, kind: input, shape index: {}]
  %s2 = inlined_call_operand.hbm [shape: bf16[2,8,16], index: 2, kind: output, shape index: {0}]
  %s3 = inlined_call_operand.hbm [shape: bf16[2,8,16], index: 3, kind: output, shape index: {1}]
  %s4 = inlined_call_operand.hbm [shape: bf16[2,8,16], index: 4, kind: output, shape index: {2}]
  %5 = xla_tuple %s2, %s3, %s4
  %s6 = sld [smem:[#allocation0]]
  $region65: #{tpu_custom_call.1} parent=0
    _
  %s8 = ssub.s32 1, %s6
  %s9 = scalar_select 0, %s8, %s6
  $region1: #{tpu_custom_call.1} parent=0
    #allocation2 [shape = 'u8[4096]{0}', space=vmem, size = 0x1000, scoped, tag = 'input window, operand 0']
    #allocation3 [shape = 's32[2]{0}', space=sflag, size = 0x8, scoped, tag = 'scoped memory for tpu_custom_call.1']
    #allocation4 [shape = 's32[2]{0}', space=sflag, size = 0x8, scoped, tag = 'scoped memory for tpu_custom_call.1']
    #allocation5 [shape = 'u8[8192]{0}', space=vmem, size = 0x2000, scoped, tag = 'input window, operand 1, single buffered']
    #allocation6 [shape = 's32[1]{0}', space=sflag, size = 0x4, scoped, tag = 'scoped memory for tpu_custom_call.1']
    #allocation7 [shape = 'u8[4096]{0}', space=vmem, size = 0x1000, scoped, tag = 'output window, operand 0']
    #allocation8 [shape = 'u8[4096]{0}', space=vmem, size = 0x1000, scoped, tag = 'output window, operand 1']
    #allocation9 [shape = 's32[2]{0}', space=sflag, size = 0x8, scoped, tag = 'scoped memory for tpu_custom_call.1']
    #allocation10 [shape = 'u8[4096]{0}', space=vmem, size = 0x1000, scoped, tag = 'output window, operand 2']
    %10 = vsyncpa [#allocation3], 0
    %s11 = scalar_lea.sflag [#allocation3], 1
    %12 = vsyncpa %s11, 0
    %13 = vsyncpa [#allocation6], 0
    %14 = vsyncpa [#allocation4], 0
    %s15 = scalar_lea.sflag [#allocation4], 1
    %16 = vsyncpa %s15, 0
    %17 = vsyncpa [#allocation9], 0
    %s18 = scalar_lea.sflag [#allocation9], 1
    %19 = vsyncpa %s18, 0
    loop: start=0, step=1, limit=4
    $region2: #{tpu_custom_call.1} parent=1 // loop_pre_header
      _
    $region3: #{tpu_custom_call.1} parent=1 // loop_header
      %s21 = sphi 0, %s25
      %p22 = scmp.ge.s32.totalorder %s21, 4
      %s28 = sphi 0, %s40
      %s29 = sphi 0, %s36
      %s30 = sphi 0, %s28
      %s31 = sphi 0, %s29
      %s32 = sphi 0, %s30
      %s33 = sphi 0, %s31
      %s45 = sphi 0, %s47
      %s48 = sphi 0, %s45
      %s49 = sphi 0, %s48
      %s65 = sphi 0, %s49
      %s69 = sphi 0, %s69
      %s71 = sphi 0, %s69
      %s72 = sphi 0, %s71
      %s86 = sphi 0, %s72
      %s94 = sphi 0, %s96
      %s97 = sphi 0, %s94
      %s98 = sphi 0, %s97
      %s114 = sphi 0, %s98
      %s122 = sphi 0, %s124
      %s125 = sphi 0, %s122
      %s126 = sphi 0, %s125
      %s142 = sphi 0, %s126
      %s150 = sphi 0, %s152
      %s153 = sphi 0, %s150
      %s154 = sphi 0, %s153
      %s170 = sphi 0, %s154
    $region4: #{tpu_custom_call.1} parent=1 // loop_header_branch
      %24 = sbr.rel (%p22) target = $region8
    $region5: #{tpu_custom_call.1} parent=1 // loop_body
      %s26 = ssub.s32 %s21, 1
      %s27 = ssub.s32 %s21, 2
      %s34 = sadd.s32 1, %s29
      %p35 = scmp.ge.s32.totalorder %s34, 1
      %s36 = scalar_select %p35, 0, %s34
      %s37 = sadd.s32 1, %s28
      %s38 = scalar_select %p35, %s37, %s28
      %p39 = scmp.ge.s32.totalorder %s38, 2
      %s40 = scalar_select %p39, 0, %s38
      %s41 = ssub.s32 %s28, %s40
      %s42 = ssub.s32 %s29, %s36
      %s43 = sor.u32 %s41, %s42
      %p44 = scmp.eq.s32.totalorder %s43, 0
      %s46 = sadd.s32 %s45, 1
      %s47 = scalar_select %p44, %s45, %s46
      %p50 = pneg %p44
      %p51 = scmp.eq.s32.totalorder %s21, 1
      %p52 = por %p50, %p51
      %p53 = scmp.ne.s32.totalorder %s45, %s48
      %p54 = scmp.eq.s32.totalorder %s21, 0
      %p55 = por %p53, %p54
      %p56 = scmp.ne.s32.totalorder %s45, %s48
      %p57 = scmp.eq.s32.totalorder %s26, 1
      %p58 = por %p56, %p57
      %p59 = scmp.ne.s32.totalorder %s48, %s49
      %p60 = scmp.eq.s32.totalorder %s26, 0
      %p61 = por %p59, %p60
      %p62 = scmp.ne.s32.totalorder %s48, %s49
      %p63 = scmp.eq.s32.totalorder %s27, 1
      %p64 = por %p62, %p63
      %p66 = scmp.ne.s32.totalorder %s49, %s65
      %p67 = scmp.eq.s32.totalorder %s27, 0
      %p68 = por %p66, %p67
      %s70 = sadd.s32 %s69, 1
      %p73 = scmp.eq.s32.totalorder %s21, 1
      %p74 = scmp.ne.s32.totalorder %s69, %s71
      %p75 = scmp.eq.s32.totalorder %s21, 0
      %p76 = por %p74, %p75
      %p77 = scmp.ne.s32.totalorder %s69, %s71
      %p78 = scmp.eq.s32.totalorder %s26, 1
      %p79 = por %p77, %p78
      %p80 = scmp.ne.s32.totalorder %s71, %s72
      %p81 = scmp.eq.s32.totalorder %s26, 0
      %p82 = por %p80, %p81
      %p83 = scmp.ne.s32.totalorder %s71, %s72
      %p84 = scmp.eq.s32.totalorder %s27, 1
      %p85 = por %p83, %p84
      %p87 = scmp.ne.s32.totalorder %s72, %s86
      %p88 = scmp.eq.s32.totalorder %s27, 0
      %p89 = por %p87, %p88
      %s90 = ssub.s32 %s28, %s40
      %s91 = ssub.s32 %s29, %s36
      %s92 = sor.u32 %s90, %s91
      %p93 = scmp.eq.s32.totalorder %s92, 0
      %s95 = sadd.s32 %s94, 1
      %s96 = scalar_select %p93, %s94, %s95
      %p99 = pneg %p93
      %p100 = scmp.eq.s32.totalorder %s21, 1
      %p101 = por %p99, %p100
      %p102 = scmp.ne.s32.totalorder %s94, %s97
      %p103 = scmp.eq.s32.totalorder %s21, 0
      %p104 = por %p102, %p103
      %p105 = scmp.ne.s32.totalorder %s94, %s97
      %p106 = scmp.eq.s32.totalorder %s26, 1
      %p107 = por %p105, %p106
      %p108 = scmp.ne.s32.totalorder %s97, %s98
      %p109 = scmp.eq.s32.totalorder %s26, 0
      %p110 = por %p108, %p109
      %p111 = scmp.ne.s32.totalorder %s97, %s98
      %p112 = scmp.eq.s32.totalorder %s27, 1
      %p113 = por %p111, %p112
      %p115 = scmp.ne.s32.totalorder %s98, %s114
      %p116 = scmp.eq.s32.totalorder %s27, 0
      %p117 = por %p115, %p116
      %s118 = ssub.s32 %s28, %s40
      %s119 = ssub.s32 %s29, %s36
      %s120 = sor.u32 %s118, %s119
      %p121 = scmp.eq.s32.totalorder %s120, 0
      %s123 = sadd.s32 %s122, 1
      %s124 = scalar_select %p121, %s122, %s123
      %p127 = pneg %p121
      %p128 = scmp.eq.s32.totalorder %s21, 1
      %p129 = por %p127, %p128
      %p130 = scmp.ne.s32.totalorder %s122, %s125
      %p131 = scmp.eq.s32.totalorder %s21, 0
      %p132 = por %p130, %p131
      %p133 = scmp.ne.s32.totalorder %s122, %s125
      %p134 = scmp.eq.s32.totalorder %s26, 1
      %p135 = por %p133, %p134
      %p136 = scmp.ne.s32.totalorder %s125, %s126
      %p137 = scmp.eq.s32.totalorder %s26, 0
      %p138 = por %p136, %p137
      %p139 = scmp.ne.s32.totalorder %s125, %s126
      %p140 = scmp.eq.s32.totalorder %s27, 1
      %p141 = por %p139, %p140
      %p143 = scmp.ne.s32.totalorder %s126, %s142
      %p144 = scmp.eq.s32.totalorder %s27, 0
      %p145 = por %p143, %p144
      %s146 = ssub.s32 %s28, %s40
      %s147 = ssub.s32 %s29, %s36
      %s148 = sor.u32 %s146, %s147
      %p149 = scmp.eq.s32.totalorder %s148, 0
      %s151 = sadd.s32 %s150, 1
      %s152 = scalar_select %p149, %s150, %s151
      %p155 = pneg %p149
      %p156 = scmp.eq.s32.totalorder %s21, 1
      %p157 = por %p155, %p156
      %p158 = scmp.ne.s32.totalorder %s150, %s153
      %p159 = scmp.eq.s32.totalorder %s21, 0
      %p160 = por %p158, %p159
      %p161 = scmp.ne.s32.totalorder %s150, %s153
      %p162 = scmp.eq.s32.totalorder %s26, 1
      %p163 = por %p161, %p162
      %p164 = scmp.ne.s32.totalorder %s153, %s154
      %p165 = scmp.eq.s32.totalorder %s26, 0
      %p166 = por %p164, %p165
      %p167 = scmp.ne.s32.totalorder %s153, %s154
      %p168 = scmp.eq.s32.totalorder %s27, 1
      %p169 = por %p167, %p168
      %p171 = scmp.ne.s32.totalorder %s154, %s170
      %p172 = scmp.eq.s32.totalorder %s27, 0
      %p173 = por %p171, %p172
      %p174 = scmp.le.s32.totalorder 1, %s21
      %p175 = scmp.lt.s32.totalorder %s21, 3
      %p176 = pnand %p174, %p175
      %p177 = pneg %p176
      // Predicated region
      $region9: #{tpu_custom_call.1} parent=5 // pred_check
        _
      $region10: #{tpu_custom_call.1} parent=5 // pred_check_branch
        %179 = sbr.rel (%p176) target = $region12
      $region11: #{tpu_custom_call.1} parent=5 // pred_region
        %s180 = ssub.s32 %s21, 1
        // Predicated region
        $region13: #{tpu_custom_call.1} parent=11 // pred_check
          %p181 = pneg %p82
        $region14: #{tpu_custom_call.1} parent=11 // pred_check_branch
          %183 = sbr.rel (%p181) target = $region16
        $region15: #{tpu_custom_call.1} parent=11 // pred_region
          %s185 = ssub.s32 256, 256
          %186 = vsyncadd [#allocation6], %s185
          %s187 = sshll.u32 [#allocation5], 4
          %s188 = int_to_ptr.vmem [resolvable:$true] %s187
          %193 = dma.hbm_to_vmem [thread:$0]  %s1, 256, %s188, [#allocation6], 64, 64, 4
        $region16: #{tpu_custom_call.1} parent=11 // pred_fallthru
          _
      $region12: #{tpu_custom_call.1} parent=5 // pred_fallthru
        _
      %p194 = scmp.lt.s32.totalorder %s21, 2
      // Predicated region
      $region17: #{tpu_custom_call.1} parent=5 // pred_check
        %p195 = pneg %p194
      $region18: #{tpu_custom_call.1} parent=5 // pred_check_branch
        %197 = sbr.rel (%p195) target = $region20
      $region19: #{tpu_custom_call.1} parent=5 // pred_region
        // Predicated region
        $region21: #{tpu_custom_call.1} parent=19 // pred_check
          %p198 = pneg %p55
        $region22: #{tpu_custom_call.1} parent=19 // pred_check_branch
          %200 = sbr.rel (%p198) target = $region24
        $region23: #{tpu_custom_call.1} parent=19 // pred_region
          %s201 = sand.u32 %s45, 1
          %s202 = scalar_lea.sflag [#allocation3], %s201
          %s203 = sand.u32 %s45, 1
          %s204 = smul.addr %s203, 4
          %s205 = scalar_lea.vmem [#allocation2], %s204
          %s207 = ssub.s32 64, 64
          %208 = vsyncadd %s202, %s207
          %s209 = sadd.s32 %s29, %s28
          %s210 = smul.addr %s209, 64
          %s211 = scalar_lea.hbm %s0, %s210
          %s213 = sshll.u32 %s205, 4
          %s214 = int_to_ptr.vmem [resolvable:$true] %s213
          %216 = dma.hbm_to_vmem [thread:$0]  %s211, 64, %s214, %s202
        $region24: #{tpu_custom_call.1} parent=19 // pred_fallthru
          _
      $region20: #{tpu_custom_call.1} parent=5 // pred_fallthru
        _
      %p217 = scmp.le.s32.totalorder 1, %s21
      %p218 = scmp.lt.s32.totalorder %s21, 3
      %p219 = pnand %p217, %p218
      %p220 = pneg %p219
      // Predicated region
      $region25: #{tpu_custom_call.1} parent=5 // pred_check
        _
      $region26: #{tpu_custom_call.1} parent=5 // pred_check_branch
        %222 = sbr.rel (%p219) target = $region28
      $region27: #{tpu_custom_call.1} parent=5 // pred_region
        %s223 = ssub.s32 %s21, 1
        %s224 = sand.u32 %s48, 1
        %s225 = scalar_lea.sflag [#allocation3], %s224
        %s226 = sand.u32 %s48, 1
        %s227 = smul.addr %s226, 4
        %s228 = scalar_lea.vmem [#allocation2], %s227
        // Predicated region
        $region29: #{tpu_custom_call.1} parent=27 // pred_check
          %p229 = pneg %p61
        $region30: #{tpu_custom_call.1} parent=27 // pred_check_branch
          %231 = sbr.rel (%p229) target = $region32
        $region31: #{tpu_custom_call.1} parent=27 // pred_region
          %232 = dma.done %s225, 64
        $region32: #{tpu_custom_call.1} parent=27 // pred_fallthru
          _
        // Predicated region
        $region33: #{tpu_custom_call.1} parent=27 // pred_check
          %p233 = pneg %p82
        $region34: #{tpu_custom_call.1} parent=27 // pred_check_branch
          %235 = sbr.rel (%p233) target = $region36
        $region35: #{tpu_custom_call.1} parent=27 // pred_region
          %236 = dma.done [#allocation6], 256
        $region36: #{tpu_custom_call.1} parent=27 // pred_fallthru
          _
        %s237 = sand.u32 %s48, 1
        %s238 = scalar_lea.sflag [#allocation3], %s237
        %s239 = sand.u32 %s48, 1
        %s240 = smul.addr %s239, 4
        %s241 = scalar_lea.vmem [#allocation2], %s240
        %p242 = pneg %p61
        %p243 = pneg %p58
        %p244 = pneg %p82
        %p245 = pneg %p79
        %p246 = pneg %p110
        %p247 = pneg %p107
        %s248 = sand.u32 %s97, 1
        %s249 = scalar_lea.sflag [#allocation4], %s248
        %s250 = sand.u32 %s97, 1
        %s251 = smul.addr %s250, 4
        %s252 = scalar_lea.vmem [#allocation7], %s251
        %p253 = pneg %p138
        %p254 = pneg %p135
        %s255 = sand.u32 %s26, 1
        %s256 = scalar_lea.sflag [#allocation9], %s255
        %s257 = sand.u32 %s125, 1
        %s258 = smul.addr %s257, 4
        %s259 = scalar_lea.vmem [#allocation8], %s258
        %p260 = pneg %p166
        %p261 = pneg %p163
        %s262 = sand.u32 %s26, 1
        %s263 = scalar_lea.sflag [#allocation9], %s262
        %s264 = sand.u32 %s153, 1
        %s265 = smul.addr %s264, 4
        %s266 = scalar_lea.vmem [#allocation10], %s265
        %v268 = vld [vmem:[%s228] sm:$0xf]
        %v269 = vld [vmem:[#allocation5] sm:$0xf]
        %v270 = vld [vmem:[#allocation5 + $0x4] sm:$0xf]
        %v271 = vld [vmem:[#allocation5 + $0x8] sm:$0xf]
        %v272 = vld [vmem:[#allocation5 + $0xc] sm:$0xf]
        %v277 = vunpack.c.l.b16 %v269
        %v278 = vunpack.c.l.b16 %v270
        %v279 = vunpack.c.l.b16 %v271
        %v280 = vunpack.c.l.b16 %v272
        %v281 = vpack.c.b16 %v278, %v277
        %v282 = vpack.c.b16 %v280, %v279
        %vm285 = vcmask 261120
        %v287 = vsel %vm285, %v268, 0
        %289 = vmatprep.subr.bf16.mxu0 0
        %290 = vmatpush1.bf16.msra.mxu0 0
        %291 = vmatprep.subr.bf16.mxu0 0
        %292 = vmatpush1.bf16.msra.mxu0 0
        %293 = vmatprep.subr.bf16.mxu0 0
        %294 = vmatpush1.bf16.msra.mxu0 0
        %295 = vmatprep.subr.bf16.mxu0 0
        %296 = vmatpush1.bf16.msra.mxu0 0
        %297 = vmatprep.subr.bf16.mxu0 0
        %298 = vmatpush1.bf16.msra.mxu0 0
        %299 = vmatprep.subr.bf16.mxu0 0
        %300 = vmatpush1.bf16.msra.mxu0 0
        %301 = vmatprep.subr.bf16.mxu0 0
        %302 = vmatpush1.bf16.msra.mxu0 %v282
        %303 = vmatprep.subr.bf16.mxu0 0
        %304 = vmatpush1.bf16.msra.mxu0 %v281
        %305 = vmatprep.subr.bf16.mxu0 0
        %306 = vmatpush2.bf16.msra.mxu0 0
        %307 = vmatprep.subr.bf16.mxu0 0
        %308 = vmatpush2.bf16.msra.mxu0 0
        %309 = vmatprep.subr.bf16.mxu0 0
        %310 = vmatpush2.bf16.msra.mxu0 0
        %311 = vmatprep.subr.bf16.mxu0 0
        %312 = vmatpush2.bf16.msra.mxu0 0
        %313 = vmatprep.subr.bf16.mxu0 0
        %314 = vmatpush2.bf16.msra.mxu0 0
        %315 = vmatprep.subr.bf16.mxu0 0
        %316 = vmatpush2.bf16.msra.mxu0 0
        %317 = vmatprep.subr.bf16.mxu0 0
        %318 = vmatpush2.bf16.msra.mxu0 0
        %319 = vmatprep.subr.bf16.mxu0 0
        %320 = vmatpush2.bf16.msra.mxu0 0
        %321 = vmatprep.mubr.bf16.mxu0 0
        %322 = vmatmul.mubr.bf16.gmra.mxu0 %v287
        %v323 = vpop.f32.mrf.mxu0
        %v324 = vadd.f32 0.0, %v323
        %v325 = vpop.f32.mrf.mxu0
        %v326 = vpop.f32.mrf.mxu0
        %v327 = vpop.f32.mrf.mxu0
        %328 = vdwg.mxu0
        %v329 = vpack.c.bf16 %v324, %v324
        %vm330 = vcmask 125952
        %331 = vst.msk [vmem:[%s252] sm:$0xf] %vm330, %v329
        %v333 = vunpack.c.l.b16 %v329
        %v334 = vpack.c.b16 %v333, %v333
        %335 = vrot.lane.b32.xlu0 %v334, 112
        %v336 = vpop.permute.xlu0 %335
        %338 = vst.msk [vmem:[%s259] sm:$0xf] %vm330, %v336
        %339 = vrot.lane.b32.xlu0 %v334, 96
        %v340 = vpop.permute.xlu0 %339
        %342 = vst.msk [vmem:[%s266] sm:$0xf] %vm330, %v340
        %s343 = sand.u32 %s97, 1
        %s344 = scalar_lea.sflag [#allocation4], %s343
        %s345 = sand.u32 %s97, 1
        %s346 = smul.addr %s345, 4
        %s347 = scalar_lea.vmem [#allocation7], %s346
        %s348 = sand.u32 %s26, 1
        %s349 = scalar_lea.sflag [#allocation9], %s348
        %s350 = sand.u32 %s125, 1
        %s351 = smul.addr %s350, 4
        %s352 = scalar_lea.vmem [#allocation8], %s351
        %s353 = sand.u32 %s26, 1
        %s354 = scalar_lea.sflag [#allocation9], %s353
        %s355 = sand.u32 %s153, 1
        %s356 = smul.addr %s355, 4
        %s357 = scalar_lea.vmem [#allocation10], %s356
        // Predicated region
        $region37: #{tpu_custom_call.1} parent=27 // pred_check
          %p358 = pneg %p107
        $region38: #{tpu_custom_call.1} parent=27 // pred_check_branch
          %360 = sbr.rel (%p358) target = $region40
        $region39: #{tpu_custom_call.1} parent=27 // pred_region
          %s362 = ssub.s32 64, 64
          %363 = vsyncadd %s344, %s362
          %s364 = sadd.s32 %s31, %s30
          %s365 = smul.addr %s364, 64
          %s366 = scalar_lea.hbm %s2, %s365
          %s368 = sshll.u32 %s347, 4
          %s369 = int_to_ptr.vmem [resolvable:$true] %s368
          %371 = dma.vmem_to_hbm [thread:$0]  %s369, 64, %s366, %s344
        $region40: #{tpu_custom_call.1} parent=27 // pred_fallthru
          _
        // Predicated region
        $region41: #{tpu_custom_call.1} parent=27 // pred_check
          %p372 = pneg %p135
        $region42: #{tpu_custom_call.1} parent=27 // pred_check_branch
          %374 = sbr.rel (%p372) target = $region44
        $region43: #{tpu_custom_call.1} parent=27 // pred_region
          %s376 = ssub.s32 64, 64
          %377 = vsyncadd %s349, %s376
          %s378 = sadd.s32 %s31, %s30
          %s379 = smul.addr %s378, 64
          %s380 = scalar_lea.hbm %s3, %s379
          %s382 = sshll.u32 %s352, 4
          %s383 = int_to_ptr.vmem [resolvable:$true] %s382
          %385 = dma.vmem_to_hbm [thread:$0]  %s383, 64, %s380, %s349
        $region44: #{tpu_custom_call.1} parent=27 // pred_fallthru
          _
        // Predicated region
        $region45: #{tpu_custom_call.1} parent=27 // pred_check
          %p386 = pneg %p163
        $region46: #{tpu_custom_call.1} parent=27 // pred_check_branch
          %388 = sbr.rel (%p386) target = $region48
        $region47: #{tpu_custom_call.1} parent=27 // pred_region
          %s390 = ssub.s32 64, 64
          %391 = vsyncadd %s354, %s390
          %s392 = sadd.s32 %s31, %s30
          %s393 = smul.addr %s392, 64
          %s394 = scalar_lea.hbm %s4, %s393
          %s396 = sshll.u32 %s357, 4
          %s397 = int_to_ptr.vmem [resolvable:$true] %s396
          %399 = dma.vmem_to_hbm [thread:$0]  %s397, 64, %s394, %s354
        $region48: #{tpu_custom_call.1} parent=27 // pred_fallthru
          _
      $region28: #{tpu_custom_call.1} parent=5 // pred_fallthru
        _
      %p400 = scmp.le.s32.totalorder 2, %s21
      // Predicated region
      $region49: #{tpu_custom_call.1} parent=5 // pred_check
        %p401 = pneg %p400
      $region50: #{tpu_custom_call.1} parent=5 // pred_check_branch
        %403 = sbr.rel (%p401) target = $region52
      $region51: #{tpu_custom_call.1} parent=5 // pred_region
        %s404 = ssub.s32 %s21, 2
        // Predicated region
        $region53: #{tpu_custom_call.1} parent=51 // pred_check
          %p405 = pneg %p113
        $region54: #{tpu_custom_call.1} parent=51 // pred_check_branch
          %407 = sbr.rel (%p405) target = $region56
        $region55: #{tpu_custom_call.1} parent=51 // pred_region
          %s408 = sand.u32 %s98, 1
          %s409 = scalar_lea.sflag [#allocation4], %s408
          %s410 = sand.u32 %s98, 1
          %s411 = smul.addr %s410, 4
          %s412 = scalar_lea.vmem [#allocation7], %s411
          %413 = dma.done %s409, 64
        $region56: #{tpu_custom_call.1} parent=51 // pred_fallthru
          _
        // Predicated region
        $region57: #{tpu_custom_call.1} parent=51 // pred_check
          %p414 = pneg %p141
        $region58: #{tpu_custom_call.1} parent=51 // pred_check_branch
          %416 = sbr.rel (%p414) target = $region60
        $region59: #{tpu_custom_call.1} parent=51 // pred_region
          %s417 = sand.u32 %s27, 1
          %s418 = scalar_lea.sflag [#allocation9], %s417
          %s419 = sand.u32 %s126, 1
          %s420 = smul.addr %s419, 4
          %s421 = scalar_lea.vmem [#allocation8], %s420
          %422 = dma.done %s418, 64
        $region60: #{tpu_custom_call.1} parent=51 // pred_fallthru
          _
        // Predicated region
        $region61: #{tpu_custom_call.1} parent=51 // pred_check
          %p423 = pneg %p169
        $region62: #{tpu_custom_call.1} parent=51 // pred_check_branch
          %425 = sbr.rel (%p423) target = $region64
        $region63: #{tpu_custom_call.1} parent=51 // pred_region
          %s426 = sand.u32 %s27, 1
          %s427 = scalar_lea.sflag [#allocation9], %s426
          %s428 = sand.u32 %s154, 1
          %s429 = smul.addr %s428, 4
          %s430 = scalar_lea.vmem [#allocation10], %s429
          %431 = dma.done %s427, 64
        $region64: #{tpu_custom_call.1} parent=51 // pred_fallthru
          _
      $region52: #{tpu_custom_call.1} parent=5 // pred_fallthru
        _
    $region6: #{tpu_custom_call.1} parent=1 // loop_footer
      %s25 = sadd.s32 1, %s21
    $region7: #{tpu_custom_call.1} parent=1 // loop_footer_branch
      %20 = sbr.rel target = $region3
    $region8: #{tpu_custom_call.1} parent=1 // loop_exit
      _
    %432 = vsyncpa [#allocation3], 1
    %s433 = scalar_lea.sflag [#allocation3], 1
    %434 = vsyncpa %s433, 1
    %435 = vsyncpa [#allocation6], 1
    %436 = vsyncpa [#allocation4], 1
    %s437 = scalar_lea.sflag [#allocation4], 1
    %438 = vsyncpa %s437, 1
    %439 = vsyncpa [#allocation9], 1
    %s440 = scalar_lea.sflag [#allocation9], 1
    %441 = vsyncpa %s440, 1

</llo_original>
